<compile_context>
chip_gen: v7x
topology: tpu7x:2x2x1
jax: 0.10.0
libtpu: 0.0.40
codegen_flags: <defaults>
</compile_context>

<pallas_src>
import jax
import jax.numpy as jnp
from jax import lax
from jax.experimental import pallas as pl
from jax.experimental.pallas import tpu as pltpu

_LANE = 128
_LANE_TILE_TARGET = 512           # 128-multiple lane tile (sweet spot 256-1024)
_STEP_BYTES_TARGET = 512 * 1024   # aim >= ~512 KiB of input per grid step
_STEP_VMEM_BUDGET = 16 << 20      # per-step inputs (double-buffered) + temps
_MAX_BATCH_TILE = 8               # rows per block (unrolled inside the kernel)


def _kld_kernel(s_ref, t_ref, o_ref):
    """Blocks: s_ref / t_ref (TB, n, TD); o_ref (TB, TD).

    For every (b, d) column: KL(softmax(t) || softmax(s)) summed over the
    distribution axis n, in the algebraically folded form
        sum_n[t_exp * (t_shift - s_shift)] / t_z + log z_s - log t_z.
    """
    tb = s_ref.shape[0]

    def one_row(i, carry):
        s = s_ref[i].astype(jnp.float32)                  # (n, TD)
        t = t_ref[i].astype(jnp.float32)                  # (n, TD)

        # Stable shifted exponentials (the shifts cancel in the folded form).
        s_shift = s - jnp.max(s, axis=0, keepdims=True)
        t_shift = t - jnp.max(t, axis=0, keepdims=True)
        t_exp = jnp.exp(t_shift)

        z_s = jnp.sum(jnp.exp(s_shift), axis=0, keepdims=True)            # (1, TD)
        t_z = jnp.sum(t_exp, axis=0, keepdims=True)                       # (1, TD)
        num = jnp.sum(t_exp * (t_shift - s_shift), axis=0, keepdims=True)  # (1, TD)

        # Tiny (1, TD) epilogue only: reciprocal + logs route to the EUP slot.
        inv_tz = pl.reciprocal(t_z, approx=False)  # approx=True fine for bf16-grade outputs
        o_ref[pl.ds(i, 1), :] = num * inv_tz + jnp.log(z_s) - jnp.log(t_z)
        return carry

    lax.fori_loop(0, tb, one_row, 0, unroll=True)


def _step_vmem_bytes(tb, n, td, in_itemsize):
    # 2 inputs x 2 pipeline buffers (input dtype) + ~5 fp32 (n, td) temporaries.
    return tb * n * td * (4 * in_itemsize) + n * td * (5 * 4)


def _pick_tiles(b, n, d, in_itemsize):
    """Choose (tb, td): batch rows and lane columns per grid step."""
    # Lane tile: a 128-multiple when d allows (lane-dense DMA/VPU/EUP and
    # unmasked output stores), otherwise the full extent (always legal).
    if d % _LANE != 0 or d <= _LANE_TILE_TARGET:
        td = d
        # TODO(synk): a very large d that is not a multiple of 128 should be
        # padded in the wrapper so it can be lane-tiled instead of taken whole.
    else:
        td = _LANE_TILE_TARGET
    # Shrink the lane tile (keeping 128-multiples) if a single row busts the
    # per-step budget (keeps double-buffering alive within v7x's 64 MiB VMEM).
    while (td > _LANE and td % _LANE == 0
           and _step_vmem_bytes(1, n, td, in_itemsize) > _STEP_VMEM_BUDGET):
        td -= _LANE
    # TODO(synk): if even (1, n, 128) busts VMEM (huge n), add an "arbitrary"
    # grid axis over n with online-softmax accumulators in scratch.
    # Batch rows per step while blocks are small: amortizes ~0.35 us/step and
    # produces bigger, more efficient DMAs.
    tb = 1
    while (tb < min(b, _MAX_BATCH_TILE)
           and _step_vmem_bytes(2 * tb, n, td, in_itemsize) <= _STEP_VMEM_BUDGET
           and tb * n * td * in_itemsize < _STEP_BYTES_TARGET):
        tb *= 2
    return min(tb, b), td


def _kld_columns(s3, t3):
    """s3, t3: [B, n, D].  Returns [B, D] = KL(softmax(t)||softmax(s)) summed
    over the distribution axis n, independently for every (b, d) column."""
    B, n, D = s3.shape
    itemsize = jnp.dtype(s3.dtype).itemsize
    tb, td = _pick_tiles(B, n, D, itemsize)

    step_bytes = _step_vmem_bytes(tb, n, td, itemsize)
    vmem_limit = int(min(max(2 * step_bytes + (4 << 20), 16 << 20), 48 << 20))

    in_spec = pl.BlockSpec((tb, n, td), lambda i, j: (i, 0, j))
    return pl.pallas_call(
        _kld_kernel,
        out_shape=jax.ShapeDtypeStruct((B, D), jnp.float32),
        grid_spec=pltpu.PrefetchScalarGridSpec(
            num_scalar_prefetch=0,
            grid=(pl.cdiv(B, tb), pl.cdiv(D, td)),
            in_specs=[in_spec, in_spec],
            out_specs=pl.BlockSpec((tb, td), lambda i, j: (i, j)),
        ),
        compiler_params=pltpu.CompilerParams(
            # Both axes are independent (the n-reduction stays inside the
            # block); "parallel" lets v7x shard the grid across its 2 TCs.
            dimension_semantics=("parallel", "parallel"),
            vmem_limit_bytes=vmem_limit,
        ),
    )(s3, t3)


def kldiv_loss(s, t, to_distribution=True, dist_dim=1, reduction="mean",
               loss_weight=1.0):
    """Pallas port of the PyTorch KLDivLoss module's forward.

    s, t: [bs, n, dim].  dist_dim (1 or 2) is the softmax/distribution axis;
    the KL is summed over that axis and then reduced per `reduction`.
    """
    if not to_distribution:
        # TODO(synk): the original module references `log_s` before assignment
        # when to_distribution=False, so that path has no defined semantics.
        raise NotImplementedError("to_distribution=False is not supported")
    if dist_dim == 2:
        s = jnp.swapaxes(s, 1, 2)   # same computation with n <-> dim swapped
        t = jnp.swapaxes(t, 1, 2)
    elif dist_dim != 1:
        raise ValueError("dist_dim must be 1 or 2")

    bs, n, dim = s.shape

    if dim < _LANE:
        # Lane-dense path for small dim: fold the (b, d) columns onto the lane
        # axis ([bs, n, dim] -> [1, n, bs*dim]).  At dim=32 the native layout
        # would waste 4x of every vreg / DMA / EUP op and pay masked stores.
        C = bs * dim
        s2 = jnp.transpose(s, (1, 0, 2)).reshape(n, C)
        t2 = jnp.transpose(t, (1, 0, 2)).reshape(n, C)
        pad = (-C) % _LANE if C > _LANE else 0
        if pad:  # zero columns are harmless and sliced off below
            s2 = jnp.pad(s2, ((0, 0), (0, pad)))
            t2 = jnp.pad(t2, ((0, 0), (0, pad)))
        per_col = _kld_columns(s2[None], t2[None])        # [1, C + pad]
        per_bd = per_col[0, :C].reshape(bs, dim)
    else:
        per_bd = _kld_columns(s, t)                       # [bs, dim]

    # per_bd[b, d] = sum_n softmax(t)[b,:,d]*(log_softmax(t)-log_softmax(s))[b,:,d]
    if reduction == "mean":
        return per_bd.mean() * loss_weight
    if reduction == "sum":
        return per_bd.sum() * loss_weight
    if reduction == "none":
        return per_bd / jnp.float32(n)   # mean over the distribution axis
    raise ValueError(f"unknown reduction: {reduction!r}")


def _reference_loss(s, t, reduction="mean", loss_weight=1.0):
    """Pure-JAX reference mirroring the PyTorch module (dist_dim=1)."""
    s = s.astype(jnp.float32)
    t = t.astype(jnp.float32)
    log_s = jax.nn.log_softmax(s, axis=1)
    t_p = jax.nn.softmax(t, axis=1)
    kl = t_p * (jnp.log(t_p) - log_s)            # [bs, n, dim]
    if reduction == "mean":
        return kl.sum(axis=1).mean() * loss_weight
    if reduction == "sum":
        return kl.sum() * loss_weight
    return kl.mean(axis=1)                       # [bs, dim]


if __name__ == "__main__":
    key = jax.random.PRNGKey(0)
    ks, kt = jax.random.split(key)

    # Small-dim case (module's [bs, n, dim] layout): exercises the lane-folded path.
    s = jax.random.normal(ks, (2, 8, 32), dtype=jnp.float32)
    t = jax.random.normal(kt, (2, 8, 32), dtype=jnp.float32)
    for red in ("mean", "sum", "none"):
        out = kldiv_loss(s, t, reduction=red, loss_weight=1.0)
        jax.block_until_ready(out)
        ref = _reference_loss(s, t, reduction=red, loss_weight=1.0)
        assert jnp.allclose(out, ref, rtol=1e-5, atol=1e-5), red

    # Native lane-dense path (dim multiple of 128), f32 and bf16 inputs
    # (bf16 halves the streamed HBM bytes; the kernel upcasts to f32).
    s2 = jax.random.normal(ks, (2, 8, 256), dtype=jnp.float32)
    t2 = jax.random.normal(kt, (2, 8, 256), dtype=jnp.float32)
    out2 = kldiv_loss(s2, t2)
    jax.block_until_ready(out2)
    assert jnp.allclose(out2, _reference_loss(s2, t2), rtol=1e-5, atol=1e-5)

    out3 = kldiv_loss(s2.astype(jnp.bfloat16), t2.astype(jnp.bfloat16))
    jax.block_until_ready(out3)
    ref3 = _reference_loss(s2.astype(jnp.bfloat16), t2.astype(jnp.bfloat16))
    assert jnp.allclose(out3, ref3, rtol=1e-5, atol=1e-5)

    print("KERNEL_OK")
</pallas_src>

<mosaic_0001>
module attributes {stable_mosaic.version = 11 : i64} {
  func.func @_kld_kernel(%arg0: i32, %arg1: i32, %arg2: memref<1x8x64xf32, #tpu.memory_space<vmem>>, %arg3: memref<1x8x64xf32, #tpu.memory_space<vmem>>, %arg4: memref<1x64xf32, #tpu.memory_space<vmem>>) attributes {dimension_semantics = [#tpu.dimension_semantics<parallel>, #tpu.dimension_semantics<parallel>], iteration_bounds = array<i64: 1, 1>, scalar_prefetch = 0 : i64, scratch_operands = 0 : i64, tpu.core_type = #tpu.core_type<tc>, window_params = [{transform_indices = @transform_0, window_bounds = array<i64: 1, 8, 64>}, {transform_indices = @transform_1, window_bounds = array<i64: 1, 8, 64>}, {transform_indices = @transform_2, window_bounds = array<i64: 1, 64>}]} {
    %c0_i32 = arith.constant 0 : i32
    %0 = arith.index_cast %c0_i32 : i32 to index
    %c0 = arith.constant 0 : index
    %c0_0 = arith.constant 0 : index
    %1 = vector.load %arg2[%0, %c0, %c0_0] : memref<1x8x64xf32, #tpu.memory_space<vmem>>, vector<1x8x64xf32>
    %2 = vector.shape_cast %1 : vector<1x8x64xf32> to vector<8x64xf32>
    %3 = arith.index_cast %c0_i32 : i32 to index
    %c0_1 = arith.constant 0 : index
    %c0_2 = arith.constant 0 : index
    %4 = vector.load %arg3[%3, %c0_1, %c0_2] : memref<1x8x64xf32, #tpu.memory_space<vmem>>, vector<1x8x64xf32>
    %5 = vector.shape_cast %4 : vector<1x8x64xf32> to vector<8x64xf32>
    %cst = arith.constant dense<0xFF800000> : vector<64xf32>
    %6 = vector.multi_reduction <maximumf>, %2, %cst [0] : vector<8x64xf32> to vector<64xf32>
    %7 = vector.shape_cast %6 : vector<64xf32> to vector<1x64xf32>
    %8 = vector.broadcast %7 : vector<1x64xf32> to vector<8x64xf32>
    %9 = arith.subf %2, %8 : vector<8x64xf32>
    %cst_3 = arith.constant dense<0xFF800000> : vector<64xf32>
    %10 = vector.multi_reduction <maximumf>, %5, %cst_3 [0] : vector<8x64xf32> to vector<64xf32>
    %11 = vector.shape_cast %10 : vector<64xf32> to vector<1x64xf32>
    %12 = vector.broadcast %11 : vector<1x64xf32> to vector<8x64xf32>
    %13 = arith.subf %5, %12 : vector<8x64xf32>
    %14 = math.exp %13 : vector<8x64xf32>
    %15 = math.exp %9 : vector<8x64xf32>
    %cst_4 = arith.constant dense<0.000000e+00> : vector<64xf32>
    %16 = vector.multi_reduction <add>, %15, %cst_4 [0] : vector<8x64xf32> to vector<64xf32>
    %17 = vector.shape_cast %16 : vector<64xf32> to vector<1x64xf32>
    %cst_5 = arith.constant dense<0.000000e+00> : vector<64xf32>
    %18 = vector.multi_reduction <add>, %14, %cst_5 [0] : vector<8x64xf32> to vector<64xf32>
    %19 = vector.shape_cast %18 : vector<64xf32> to vector<1x64xf32>
    %20 = arith.subf %13, %9 : vector<8x64xf32>
    %21 = arith.mulf %14, %20 : vector<8x64xf32>
    %cst_6 = arith.constant dense<0.000000e+00> : vector<64xf32>
    %22 = vector.multi_reduction <add>, %21, %cst_6 [0] : vector<8x64xf32> to vector<64xf32>
    %23 = vector.shape_cast %22 : vector<64xf32> to vector<1x64xf32>
    %24 = tpu.reciprocal %19 : vector<1x64xf32> -> vector<1x64xf32>
    %25 = arith.mulf %23, %24 : vector<1x64xf32>
    %26 = math.log %17 : vector<1x64xf32>
    %27 = arith.addf %25, %26 : vector<1x64xf32>
    %28 = math.log %19 : vector<1x64xf32>
    %29 = arith.subf %27, %28 : vector<1x64xf32>
    %30 = arith.index_cast %c0_i32 : i32 to index
    %c0_7 = arith.constant 0 : index
    %31 = vector.load %arg4[%30, %c0_7] : memref<1x64xf32, #tpu.memory_space<vmem>>, vector<1x64xf32>
    tpu.vector_store %arg4[%30, %c0_7], %29 {strides = array<i32>} : memref<1x64xf32, #tpu.memory_space<vmem>>, vector<1x64xf32>,
    %c1_i32 = arith.constant 1 : i32
    return
  }
  func.func @transform_0(%arg0: i32, %arg1: i32) -> (i32, i32, i32) {
    %c0_i32 = arith.constant 0 : i32
    %c0_i32_0 = arith.constant 0 : i32
    return %arg0, %c0_i32, %arg1 : i32, i32, i32
  }
  func.func @transform_1(%arg0: i32, %arg1: i32) -> (i32, i32, i32) {
    %c0_i32 = arith.constant 0 : i32
    %c0_i32_0 = arith.constant 0 : i32
    return %arg0, %c0_i32, %arg1 : i32, i32, i32
  }
  func.func @transform_2(%arg0: i32, %arg1: i32) -> (i32, i32) {
    %c0_i32 = arith.constant 0 : i32
    return %arg0, %arg1 : i32, i32
  }
}

</mosaic_0001>

<llo_original>
// kernel: tpu_custom_call.1
$region0: #{tpu_custom_call.1}
  #allocation0 [shape = 'u32[]', space=smem, size = 0x4, offset = 0x4, fixed_abs, tag = 'smem constant byte address 0x4 - core index']
  #allocation1 [shape = 'u32[144,128]{1,0:T(1,128)}', space=vmem, size = 0x12000, scoped, tag = 'internal scratch']
  %s0 = inlined_call_operand.hbm [shape: f32[1,8,64], index: 0, kind: input, shape index: {}]
  %s1 = inlined_call_operand.hbm [shape: f32[1,8,64], index: 1, kind: input, shape index: {}]
  %s2 = inlined_call_operand.hbm [shape: f32[1,64], index: 2, kind: output, shape index: {}]
  %s3 = sld [smem:[#allocation0]]
  $region26: #{tpu_custom_call.1} parent=0
    _
  %s5 = ssub.s32 1, %s3
  %s6 = scalar_select 0, %s5, %s3
  $region1: #{tpu_custom_call.1} parent=0
    #allocation2 [shape = 'u8[4096]{0}', space=vmem, size = 0x1000, scoped, tag = 'input window, operand 0, single buffered']
    #allocation3 [shape = 's32[1]{0}', space=sflag, size = 0x4, scoped, tag = 'scoped memory for tpu_custom_call.1']
    #allocation4 [shape = 's32[1]{0}', space=sflag, size = 0x4, scoped, tag = 'scoped memory for tpu_custom_call.1']
    #allocation5 [shape = 'u8[4096]{0}', space=vmem, size = 0x1000, scoped, tag = 'input window, operand 1, single buffered']
    #allocation6 [shape = 's32[1]{0}', space=sflag, size = 0x4, scoped, tag = 'scoped memory for tpu_custom_call.1']
    #allocation7 [shape = 'u8[512]{0}', space=vmem, size = 0x400, scoped, tag = 'output window, operand 0, single buffered']
    %7 = vsyncpa [#allocation3], 0
    %8 = vsyncpa [#allocation6], 0
    %9 = vsyncpa [#allocation4], 0
    // Predicated region
    $region2: #{tpu_custom_call.1} parent=1 // pred_check
      _
    $region3: #{tpu_custom_call.1} parent=1 // pred_check_branch
      %11 = sbr.rel (0) target = $region5
    $region4: #{tpu_custom_call.1} parent=1 // pred_region
      %s13 = ssub.s32 128, 128
      %14 = vsyncadd [#allocation3], %s13
      %s16 = sshll.u32 [#allocation2], 4
      %s17 = int_to_ptr.vmem [resolvable:$true] %s16
      %19 = dma.hbm_to_vmem [thread:$0]  %s0, 128, %s17, [#allocation3]
    $region5: #{tpu_custom_call.1} parent=1 // pred_fallthru
      _
    // Predicated region
    $region6: #{tpu_custom_call.1} parent=1 // pred_check
      _
    $region7: #{tpu_custom_call.1} parent=1 // pred_check_branch
      %21 = sbr.rel (0) target = $region9
    $region8: #{tpu_custom_call.1} parent=1 // pred_region
      %s23 = ssub.s32 128, 128
      %24 = vsyncadd [#allocation6], %s23
      %s26 = sshll.u32 [#allocation5], 4
      %s27 = int_to_ptr.vmem [resolvable:$true] %s26
      %29 = dma.hbm_to_vmem [thread:$0]  %s1, 128, %s27, [#allocation6]
    $region9: #{tpu_custom_call.1} parent=1 // pred_fallthru
      _
    // Predicated region
    $region10: #{tpu_custom_call.1} parent=1 // pred_check
      _
    $region11: #{tpu_custom_call.1} parent=1 // pred_check_branch
      %31 = sbr.rel (0) target = $region13
    $region12: #{tpu_custom_call.1} parent=1 // pred_region
      %32 = dma.done [#allocation3], 128
    $region13: #{tpu_custom_call.1} parent=1 // pred_fallthru
      _
    // Predicated region
    $region14: #{tpu_custom_call.1} parent=1 // pred_check
      _
    $region15: #{tpu_custom_call.1} parent=1 // pred_check_branch
      %34 = sbr.rel (0) target = $region17
    $region16: #{tpu_custom_call.1} parent=1 // pred_region
      %35 = dma.done [#allocation6], 128
    $region17: #{tpu_custom_call.1} parent=1 // pred_fallthru
      _
    %v36 = vld [vmem:[#allocation2] sm:$0xff]
    %v37 = vld [vmem:[#allocation5] sm:$0xff]
    %vm38 = vcmask 523264
    %v39 = vsel %vm38, %v36, -inf
    %v40 = vrot.slane %v39, 4
    %v41 = vmax.f32 %v39, %v40
    %v42 = vrot.slane %v41, 2
    %v43 = vmax.f32 %v41, %v42
    %v44 = vrot.slane %v43, 1
    %v45 = vmax.f32 %v43, %v44
    %v46 = vsub.f32 %v36, %v45
    %v47 = vsel %vm38, %v37, -inf
    %v48 = vrot.slane %v47, 4
    %v49 = vmax.f32 %v47, %v48
    %v50 = vrot.slane %v49, 2
    %v51 = vmax.f32 %v49, %v50
    %v52 = vrot.slane %v51, 1
    %v53 = vmax.f32 %v51, %v52
    %v54 = vsub.f32 %v37, %v53
    %v55 = vmul.f32 %v54, 1.442695
    %v56 = vpow.pop %v55
    %v57 = vmul.f32 %v46, 1.442695
    %v58 = vpow.pop %v57
    %v59 = vsel %vm38, %v58, 0.0
    %v60 = vrot.slane %v59, 4
    %v61 = vadd.f32 %v59, %v60
    %v62 = vrot.slane %v61, 2
    %v63 = vadd.f32 %v61, %v62
    %v64 = vrot.slane %v63, 1
    %v65 = vadd.f32 %v63, %v64
    %v66 = vsel %vm38, %v56, 0.0
    %v67 = vrot.slane %v66, 4
    %v68 = vadd.f32 %v66, %v67
    %v69 = vrot.slane %v68, 2
    %v70 = vadd.f32 %v68, %v69
    %v71 = vrot.slane %v70, 1
    %v72 = vadd.f32 %v70, %v71
    %v73 = vsub.f32 %v54, %v46
    %v74 = vmul.f32 %v56, %v73
    %v75 = vsel %vm38, %v74, 0.0
    %v76 = vrot.slane %v75, 4
    %v77 = vadd.f32 %v75, %v76
    %v78 = vrot.slane %v77, 2
    %v79 = vadd.f32 %v77, %v78
    %v80 = vrot.slane %v79, 1
    %v81 = vadd.f32 %v79, %v80
    %v82 = vrcp.pop %v72
    %v83 = vmul.f32 %v81, %v82
    %v84 = vlog2.pop %v65
    %v85 = vmul.f32 %v84, 0.6931472
    %v86 = vadd.f32 %v83, %v85
    %v87 = vlog2.pop %v72
    %v88 = vmul.f32 %v87, 0.6931472
    %v89 = vsub.f32 %v86, %v88
    %vm90 = vcmask 516096
    %91 = vst.msk [vmem:[#allocation7] sm:$0x1] %vm90, %v89
    // Predicated region
    $region18: #{tpu_custom_call.1} parent=1 // pred_check
      _
    $region19: #{tpu_custom_call.1} parent=1 // pred_check_branch
      %93 = sbr.rel (0) target = $region21
    $region20: #{tpu_custom_call.1} parent=1 // pred_region
      %s95 = ssub.s32 16, 16
      %96 = vsyncadd [#allocation4], %s95
      %s98 = sshll.u32 [#allocation7], 4
      %s99 = int_to_ptr.vmem [resolvable:$true] %s98
      %101 = dma.vmem_to_hbm [thread:$0]  %s99, 16, %s2, [#allocation4]
    $region21: #{tpu_custom_call.1} parent=1 // pred_fallthru
      _
    // Predicated region
    $region22: #{tpu_custom_call.1} parent=1 // pred_check
      _
    $region23: #{tpu_custom_call.1} parent=1 // pred_check_branch
      %103 = sbr.rel (0) target = $region25
    $region24: #{tpu_custom_call.1} parent=1 // pred_region
      %104 = dma.done [#allocation4], 16
    $region25: #{tpu_custom_call.1} parent=1 // pred_fallthru
      _
    %105 = vsyncpa [#allocation3], 1
    %106 = vsyncpa [#allocation6], 1
    %107 = vsyncpa [#allocation4], 1

</llo_original>
